<compile_context>
chip_gen: v7x
topology: tpu7x:2x2x1
jax: 0.10.0
libtpu: 0.0.40
codegen_flags: <defaults>
</compile_context>

<pallas_src>
import functools

import jax
import jax.numpy as jnp
from jax.experimental import pallas as pl
from jax.experimental.pallas import tpu as pltpu


def _spectral_attention_kernel(x_ref, w_ref, b_ref, mask_ref, o_ref, *, d_pad):
    # x_ref: (N, F)      fused rows of block_b batch elements, N = block_b*C
    # w_ref: (F, 3*Dp)   fused [Wq*scale | Wk | Wv], each zero-padded to Dp
    # b_ref: (1, 3*Dp)   fused [bq*scale | bk | bv], zero-padded
    # mask_ref: (N, N)   additive block-diagonal mask (0 within batch, -1e30 off)
    # o_ref: (N, Dp)     lane-dense output (true D sliced out in the wrapper)

    # Fused QKV projection: one (N, F) @ (F, 3*Dp) MXU push + one bias add.
    qkv = jnp.dot(x_ref[...], w_ref[...],
                  preferred_element_type=jnp.float32) + b_ref[...]

    # 128-lane-aligned static slices (offsets 0 / Dp / 2*Dp): no relayout.
    q = qkv[:, 0 * d_pad:1 * d_pad]
    k = qkv[:, 1 * d_pad:2 * d_pad]
    v = qkv[:, 2 * d_pad:3 * d_pad]

    # Single block-diagonal scores matmul over all rows; the zero-padded K
    # columns contribute nothing.  Contracting dim is the last axis of both
    # operands (no explicit transpose op emitted).
    scores = jax.lax.dot_general(q, k, (((1,), (1,)), ((), ())),
                                 preferred_element_type=jnp.float32)
    scores = scores + mask_ref[...]            # mask cross-batch attention

    # Numerically-stable softmax; approx reciprocal uses the idle EUP slot.
    m = jnp.max(scores, axis=-1, keepdims=True)
    p = jnp.exp(scores - m)
    denom = jnp.sum(p, axis=-1, keepdims=True)
    weights = p * pl.reciprocal(denom, approx=True)

    # Single (N, N) @ (N, Dp) output matmul; padded V columns stay zero.
    out = jnp.dot(weights, v, preferred_element_type=jnp.float32)
    o_ref[...] = out.astype(o_ref.dtype)


def _choose_block_b(batch, channels, max_rows=512):
    """Largest divisor of `batch` with block_b*channels <= max_rows.

    The fused-attention scores tile is (block_b*C, block_b*C) f32, so the cap
    bounds in-kernel VMEM.  For small problems this collapses the grid to a
    single step (the ~0.35us fixed per-step overhead dominates there)."""
    best = 1
    for cand in range(1, batch + 1):
        if batch % cand == 0 and cand * channels <= max_rows:
            best = cand
    return best


def spectral_attention(x, wq, bq, wk, bk, wv, bv, *, block_b=None):
    """x: (B, C, F); w*: (F, D) (pre-transposed vs. torch); b*: (D,).

    Returns (B, C, D) == softmax(Q K^T / sqrt(D)) V with Q/K/V = x @ w* + b*.
    """
    B, C, F_dim = x.shape
    D = wq.shape[1]
    Dp = ((D + 127) // 128) * 128              # 128-lane-aligned section width
    scale = 1.0 / (float(D) ** 0.5)            # original: / K.shape[-1]**0.5

    # Fuse + pad QKV parameters outside the kernel (one-time XLA work).
    # The 1/sqrt(D) scale is folded into the Q section.
    def pad_w(w):
        return jnp.pad(w, ((0, 0), (0, Dp - D)))

    def pad_b(b):
        return jnp.pad(b, (0, Dp - D))

    w_qkv = jnp.concatenate([pad_w(wq * scale), pad_w(wk), pad_w(wv)], axis=1)
    b_qkv = jnp.concatenate([pad_b(bq * scale), pad_b(bk), pad_b(bv)],
                            axis=0).reshape(1, 3 * Dp)

    if block_b is None:
        block_b = _choose_block_b(B, C)
    assert B % block_b == 0, (B, block_b)
    grid = (B // block_b,)
    n_rows = block_b * C

    # Additive block-diagonal mask for the fused (N, N) scores: identical for
    # every grid step, so its BlockSpec index_map is constant (stays resident).
    batch_id = jnp.arange(n_rows, dtype=jnp.int32) // C
    mask = jnp.where(batch_id[:, None] == batch_id[None, :], 0.0,
                     -1e30).astype(jnp.float32)

    # Present x as 2D rows (free row-major reshape in the wrapper).
    x2d = x.reshape(B * C, F_dim)

    kernel = functools.partial(_spectral_attention_kernel, d_pad=Dp)

    out_padded = pl.pallas_call(
        kernel,
        out_shape=jax.ShapeDtypeStruct((B * C, Dp), x.dtype),
        grid_spec=pl.GridSpec(
            grid=grid,
            in_specs=[
                pl.BlockSpec((n_rows, F_dim), lambda b: (b, 0)),     # x rows
                pl.BlockSpec((F_dim, 3 * Dp), lambda b: (0, 0)),     # fused W
                pl.BlockSpec((1, 3 * Dp), lambda b: (0, 0)),         # fused b
                pl.BlockSpec((n_rows, n_rows), lambda b: (0, 0)),    # mask
            ],
            out_specs=pl.BlockSpec((n_rows, Dp), lambda b: (b, 0)),  # lane-dense
        ),
        compiler_params=pltpu.CompilerParams(
            dimension_semantics=("parallel",)),
    )(x2d, w_qkv, b_qkv, mask)

    # Drop the zero-padded columns and restore (B, C, D).
    return out_padded[:, :D].reshape(B, C, D)


def _reference(x, wq, bq, wk, bk, wv, bv):
    q = jnp.einsum("bcf,fd->bcd", x, wq) + bq
    k = jnp.einsum("bcf,fd->bcd", x, wk) + bk
    v = jnp.einsum("bcf,fd->bcd", x, wv) + bv
    scores = jnp.einsum("bcd,bkd->bck", q, k) / (k.shape[-1] ** 0.5)
    w = jax.nn.softmax(scores, axis=-1)
    return jnp.einsum("bck,bkd->bcd", w, v)


if __name__ == "__main__":
    # Small shapes consistent with the module: input_shape=(C, F)=(8, 16),
    # d_model=32, batch=8.  block_b -> 8, grid=(1,): single fused step.
    B, C, F_dim, d_model = 8, 8, 16, 32

    key = jax.random.PRNGKey(0)
    kx, kq, kbq, kk, kbk, kv, kbv = jax.random.split(key, 7)

    x = jax.random.normal(kx, (B, C, F_dim), dtype=jnp.float32)

    # Deterministic nn.Linear-style init (uniform in +/- 1/sqrt(fan_in)),
    # weights stored pre-transposed as (F, d_model).
    bound = 1.0 / (F_dim ** 0.5)
    wq = jax.random.uniform(kq, (F_dim, d_model), jnp.float32, -bound, bound)
    bq = jax.random.uniform(kbq, (d_model,), jnp.float32, -bound, bound)
    wk = jax.random.uniform(kk, (F_dim, d_model), jnp.float32, -bound, bound)
    bk = jax.random.uniform(kbk, (d_model,), jnp.float32, -bound, bound)
    wv = jax.random.uniform(kv, (F_dim, d_model), jnp.float32, -bound, bound)
    bv = jax.random.uniform(kbv, (d_model,), jnp.float32, -bound, bound)

    out = spectral_attention(x, wq, bq, wk, bk, wv, bv)
    out = jax.block_until_ready(out)

    ref = _reference(x, wq, bq, wk, bk, wv, bv)
    assert out.shape == (B, C, d_model), out.shape
    # Tolerance loosened for the approx (EUP vrcp) softmax reciprocal.
    assert jnp.allclose(out, ref, atol=2e-3, rtol=2e-3), \
        float(jnp.max(jnp.abs(out - ref)))

    print("KERNEL_OK")
</pallas_src>

<mosaic_0001>
module attributes {stable_mosaic.version = 11 : i64} {
  func.func @_spectral_attention_kernel(%arg0: i32, %arg1: memref<64x16xf32, #tpu.memory_space<vmem>>, %arg2: memref<16x384xf32, #tpu.memory_space<vmem>>, %arg3: memref<1x384xf32, #tpu.memory_space<vmem>>, %arg4: memref<64x64xf32, #tpu.memory_space<vmem>>, %arg5: memref<64x128xf32, #tpu.memory_space<vmem>>) attributes {dimension_semantics = [#tpu.dimension_semantics<parallel>], iteration_bounds = array<i64: 1>, scalar_prefetch = 0 : i64, scratch_operands = 0 : i64, tpu.core_type = #tpu.core_type<tc>, window_params = [{transform_indices = @transform_0, window_bounds = array<i64: 64, 16>}, {pipeline_mode = #tpu.pipeline_mode<synchronous>, transform_indices = @transform_1, window_bounds = array<i64: 16, 384>}, {pipeline_mode = #tpu.pipeline_mode<synchronous>, transform_indices = @transform_2, window_bounds = array<i64: 1, 384>}, {pipeline_mode = #tpu.pipeline_mode<synchronous>, transform_indices = @transform_3, window_bounds = array<i64: 64, 64>}, {transform_indices = @transform_4, window_bounds = array<i64: 64, 128>}]} {
    %c0 = arith.constant 0 : index
    %c0_0 = arith.constant 0 : index
    %0 = vector.load %arg1[%c0, %c0_0] : memref<64x16xf32, #tpu.memory_space<vmem>>, vector<64x16xf32>
    %c0_1 = arith.constant 0 : index
    %c0_2 = arith.constant 0 : index
    %1 = vector.load %arg2[%c0_1, %c0_2] : memref<16x384xf32, #tpu.memory_space<vmem>>, vector<16x384xf32>
    %cst = arith.constant dense<0.000000e+00> : vector<64x384xf32>
    %2 = tpu.matmul %0, %1, %cst {dimension_numbers = #tpu.dot_dimension_numbers<[1], [0], [0], [1], [0, 0, 1, 1], [], []>} : vector<64x16xf32>, vector<16x384xf32>, vector<64x384xf32> -> vector<64x384xf32>
    %c0_3 = arith.constant 0 : index
    %c0_4 = arith.constant 0 : index
    %3 = vector.load %arg3[%c0_3, %c0_4] : memref<1x384xf32, #tpu.memory_space<vmem>>, vector<1x384xf32>
    %4 = vector.broadcast %3 : vector<1x384xf32> to vector<64x384xf32>
    %5 = arith.addf %2, %4 : vector<64x384xf32>
    %6 = vector.extract_strided_slice %5 {offsets = [0, 0], sizes = [64, 128], strides = [1, 1]} : vector<64x384xf32> to vector<64x128xf32>
    %7 = vector.extract_strided_slice %5 {offsets = [0, 128], sizes = [64, 128], strides = [1, 1]} : vector<64x384xf32> to vector<64x128xf32>
    %8 = vector.extract_strided_slice %5 {offsets = [0, 256], sizes = [64, 128], strides = [1, 1]} : vector<64x384xf32> to vector<64x128xf32>
    %cst_5 = arith.constant dense<0.000000e+00> : vector<64x64xf32>
    %9 = tpu.matmul %6, %7, %cst_5 {dimension_numbers = #tpu.dot_dimension_numbers<[1], [1], [0], [0], [0, 0, 1, 0], [], []>} : vector<64x128xf32>, vector<64x128xf32>, vector<64x64xf32> -> vector<64x64xf32>
    %c0_6 = arith.constant 0 : index
    %c0_7 = arith.constant 0 : index
    %10 = vector.load %arg4[%c0_6, %c0_7] : memref<64x64xf32, #tpu.memory_space<vmem>>, vector<64x64xf32>
    %11 = arith.addf %9, %10 : vector<64x64xf32>
    %cst_8 = arith.constant dense<0xFF800000> : vector<64xf32>
    %12 = vector.multi_reduction <maximumf>, %11, %cst_8 [1] : vector<64x64xf32> to vector<64xf32>
    %13 = vector.shape_cast %12 : vector<64xf32> to vector<64x1xf32>
    %14 = vector.broadcast %13 : vector<64x1xf32> to vector<64x64xf32>
    %15 = arith.subf %11, %14 : vector<64x64xf32>
    %16 = math.exp %15 : vector<64x64xf32>
    %cst_9 = arith.constant dense<0.000000e+00> : vector<64xf32>
    %17 = vector.multi_reduction <add>, %16, %cst_9 [1] : vector<64x64xf32> to vector<64xf32>
    %18 = vector.shape_cast %17 : vector<64xf32> to vector<64x1xf32>
    %19 = tpu.reciprocal %18 {approx = true} : vector<64x1xf32> -> vector<64x1xf32>
    %20 = vector.broadcast %19 : vector<64x1xf32> to vector<64x64xf32>
    %21 = arith.mulf %16, %20 : vector<64x64xf32>
    %cst_10 = arith.constant dense<0.000000e+00> : vector<64x128xf32>
    %22 = tpu.matmul %21, %8, %cst_10 {dimension_numbers = #tpu.dot_dimension_numbers<[1], [0], [0], [1], [0, 0, 1, 1], [], []>} : vector<64x64xf32>, vector<64x128xf32>, vector<64x128xf32> -> vector<64x128xf32>
    %c0_11 = arith.constant 0 : index
    %c0_12 = arith.constant 0 : index
    %23 = vector.load %arg5[%c0_11, %c0_12] : memref<64x128xf32, #tpu.memory_space<vmem>>, vector<64x128xf32>
    tpu.vector_store %arg5[%c0_11, %c0_12], %22 {strides = array<i32>} : memref<64x128xf32, #tpu.memory_space<vmem>>, vector<64x128xf32>,
    return
  }
  func.func @transform_0(%arg0: i32) -> (i32, i32) {
    %c0_i32 = arith.constant 0 : i32
    %c0_i32_0 = arith.constant 0 : i32
    return %arg0, %c0_i32 : i32, i32
  }
  func.func @transform_1(%arg0: i32) -> (i32, i32) {
    %c0_i32 = arith.constant 0 : i32
    %c0_i32_0 = arith.constant 0 : i32
    %c0_i32_1 = arith.constant 0 : i32
    return %c0_i32, %c0_i32_0 : i32, i32
  }
  func.func @transform_2(%arg0: i32) -> (i32, i32) {
    %c0_i32 = arith.constant 0 : i32
    %c0_i32_0 = arith.constant 0 : i32
    %c0_i32_1 = arith.constant 0 : i32
    return %c0_i32, %c0_i32_0 : i32, i32
  }
  func.func @transform_3(%arg0: i32) -> (i32, i32) {
    %c0_i32 = arith.constant 0 : i32
    %c0_i32_0 = arith.constant 0 : i32
    %c0_i32_1 = arith.constant 0 : i32
    return %c0_i32, %c0_i32_0 : i32, i32
  }
  func.func @transform_4(%arg0: i32) -> (i32, i32) {
    %c0_i32 = arith.constant 0 : i32
    %c0_i32_0 = arith.constant 0 : i32
    return %arg0, %c0_i32 : i32, i32
  }
}

</mosaic_0001>

<llo_original>
// kernel: tpu_custom_call.1
$region0: #{tpu_custom_call.1}
  #allocation0 [shape = 'u32[]', space=smem, size = 0x4, offset = 0x4, fixed_abs, tag = 'smem constant byte address 0x4 - core index']
  #allocation1 [shape = 'u32[144,128]{1,0:T(1,128)}', space=vmem, size = 0x12000, scoped, tag = 'internal scratch']
  %s0 = inlined_call_operand.vmem [shape: f32[64,16], index: 0, kind: input, shape index: {}]
  %s1 = inlined_call_operand.hbm [shape: f32[16,384], index: 1, kind: input, shape index: {}]
  %s2 = inlined_call_operand.vmem [shape: f32[1,384], index: 2, kind: input, shape index: {}]
  %s3 = inlined_call_operand.vmem [shape: f32[64,64], index: 3, kind: input, shape index: {}]
  %s4 = inlined_call_operand.hbm [shape: f32[64,128], index: 4, kind: output, shape index: {}]
  %s5 = sld [smem:[#allocation0]]
  $region30: #{tpu_custom_call.1} parent=0
    _
  %s7 = ssub.s32 1, %s5
  %s8 = scalar_select 0, %s7, %s5
  $region1: #{tpu_custom_call.1} parent=0
    #allocation2 [shape = 'u8[24576]{0}', space=vmem, size = 0x6000, scoped, tag = 'input window, operand 1, single buffered']
    #allocation3 [shape = 's32[1]{0}', space=sflag, size = 0x4, scoped, tag = 'scoped memory for tpu_custom_call.1']
    #allocation4 [shape = 's32[1]{0}', space=sflag, size = 0x4, scoped, tag = 'scoped memory for tpu_custom_call.1']
    #allocation5 [shape = 'u8[32768]{0}', space=vmem, size = 0x8000, scoped, tag = 'output window, operand 0, single buffered']
    %9 = vsyncpa [#allocation3], 0
    %10 = vsyncpa [#allocation4], 0
    // Predicated region
    $region2: #{tpu_custom_call.1} parent=1 // pred_check
      _
    $region3: #{tpu_custom_call.1} parent=1 // pred_check_branch
      %12 = sbr.rel (0) target = $region5
    $region4: #{tpu_custom_call.1} parent=1 // pred_region
      _
    $region5: #{tpu_custom_call.1} parent=1 // pred_fallthru
      _
    // Predicated region
    $region6: #{tpu_custom_call.1} parent=1 // pred_check
      _
    $region7: #{tpu_custom_call.1} parent=1 // pred_check_branch
      %14 = sbr.rel (0) target = $region9
    $region8: #{tpu_custom_call.1} parent=1 // pred_region
      %s16 = ssub.s32 768, 768
      %17 = vsyncadd [#allocation3], %s16
      %s18 = sshll.u32 [#allocation2], 4
      %s19 = int_to_ptr.vmem [resolvable:$true] %s18
      %24 = dma.hbm_to_vmem [thread:$0]  %s1, 768, %s19, [#allocation3], 384, 384, 24
    $region9: #{tpu_custom_call.1} parent=1 // pred_fallthru
      _
    // Predicated region
    $region10: #{tpu_custom_call.1} parent=1 // pred_check
      _
    $region11: #{tpu_custom_call.1} parent=1 // pred_check_branch
      %26 = sbr.rel (0) target = $region13
    $region12: #{tpu_custom_call.1} parent=1 // pred_region
      _
    $region13: #{tpu_custom_call.1} parent=1 // pred_fallthru
      _
    // Predicated region
    $region14: #{tpu_custom_call.1} parent=1 // pred_check
      _
    $region15: #{tpu_custom_call.1} parent=1 // pred_check_branch
      %28 = sbr.rel (0) target = $region17
    $region16: #{tpu_custom_call.1} parent=1 // pred_region
      _
    $region17: #{tpu_custom_call.1} parent=1 // pred_fallthru
      _
    // Predicated region
    $region18: #{tpu_custom_call.1} parent=1 // pred_check
      _
    $region19: #{tpu_custom_call.1} parent=1 // pred_check_branch
      %30 = sbr.rel (0) target = $region21
    $region20: #{tpu_custom_call.1} parent=1 // pred_region
      %31 = dma.done [#allocation3], 768
    $region21: #{tpu_custom_call.1} parent=1 // pred_fallthru
      _
    %v32 = vld [vmem:[%s0] sm:$0xff]
    %v33 = vld [vmem:[%s0 + $0x8] sm:$0xff]
    %v34 = vld [vmem:[%s0 + $0x10] sm:$0xff]
    %v35 = vld [vmem:[%s0 + $0x18] sm:$0xff]
    %v36 = vld [vmem:[%s0 + $0x20] sm:$0xff]
    %v37 = vld [vmem:[%s0 + $0x28] sm:$0xff]
    %v38 = vld [vmem:[%s0 + $0x30] sm:$0xff]
    %v39 = vld [vmem:[%s0 + $0x38] sm:$0xff]
    %v40 = vld [vmem:[#allocation2] sm:$0xff]
    %v41 = vld [vmem:[#allocation2 + $0x8] sm:$0xff]
    %v42 = vld [vmem:[#allocation2 + $0x10] sm:$0xff]
    %v43 = vld [vmem:[#allocation2 + $0x18] sm:$0xff]
    %v44 = vld [vmem:[#allocation2 + $0x20] sm:$0xff]
    %v45 = vld [vmem:[#allocation2 + $0x28] sm:$0xff]
    %v46 = vld [vmem:[%s2] sm:$0x7]
    %v48 = vlaneseq
    %v49 = vshrl.u32 %v48, 7
    %v50 = vsub.s32 0, %v49
    %v51 = vrot.slane %v46, %v50
    %v52 = vlaneseq
    %v53 = vshrl.u32 %v52, 7
    %v54 = vsub.s32 1, %v53
    %v55 = vrot.slane %v46, %v54
    %v56 = vlaneseq
    %v57 = vshrl.u32 %v56, 7
    %v58 = vsub.s32 2, %v57
    %v59 = vrot.slane %v46, %v58
    %vm63 = vcmask 130048
    %v65 = vsel %vm63, %v32, 0
    %v68 = vsel %vm63, %v33, 0
    %v71 = vsel %vm63, %v34, 0
    %v74 = vsel %vm63, %v35, 0
    %v77 = vsel %vm63, %v36, 0
    %v80 = vsel %vm63, %v37, 0
    %v83 = vsel %vm63, %v38, 0
    %v86 = vsel %vm63, %v39, 0
    %88 = vmatprep.subr.mxu0 %v41
    %89 = vmatpush1.msra.mxu0 %v40
    %90 = vmatprep.subr.mxu0 %v44
    %91 = vmatpush1.msra.mxu0 %v43
    %92 = vmatprep.subr.mxu0 0.0
    %93 = vmatpush1.msra.mxu0 0.0
    %94 = vmatprep.subr.mxu0 0.0
    %95 = vmatpush1.msra.mxu0 0.0
    %96 = vmatprep.subr.mxu0 0.0
    %97 = vmatpush1.msra.mxu0 0.0
    %98 = vmatprep.subr.mxu0 0.0
    %99 = vmatpush1.msra.mxu0 0.0
    %100 = vmatprep.subr.mxu0 0.0
    %101 = vmatpush1.msra.mxu0 0.0
    %102 = vmatprep.subr.mxu0 0.0
    %103 = vmatpush1.msra.mxu0 0.0
    %104 = vmatprep.subr.mxu0 0.0
    %105 = vmatpush1.msra.mxu0 0.0
    %106 = vmatprep.subr.mxu0 0.0
    %107 = vmatpush1.msra.mxu0 0.0
    %108 = vmatprep.subr.mxu0 0.0
    %109 = vmatpush1.msra.mxu0 0.0
    %110 = vmatprep.subr.mxu0 0.0
    %111 = vmatpush1.msra.mxu0 0.0
    %112 = vmatprep.subr.mxu0 0.0
    %113 = vmatpush1.msra.mxu0 0.0
    %114 = vmatprep.subr.mxu0 0.0
    %115 = vmatpush1.msra.mxu0 0.0
    %116 = vmatprep.subr.mxu0 0.0
    %117 = vmatpush1.msra.mxu0 0.0
    %118 = vmatprep.subr.mxu0 0.0
    %119 = vmatpush1.msra.mxu0 0.0
    %120 = vmatprep.subr.mxu0 0.0
    %121 = vmatpush1.msra.mxu0 0.0
    %122 = vmatprep.subr.mxu0 0.0
    %123 = vmatpush1.msra.mxu0 0.0
    %124 = vmatprep.subr.mxu0 0.0
    %125 = vmatpush1.msra.mxu0 0.0
    %126 = vmatprep.subr.mxu0 0.0
    %127 = vmatpush1.msra.mxu0 0.0
    %128 = vmatprep.subr.mxu0 0.0
    %129 = vmatpush1.msra.mxu0 0.0
    %130 = vmatprep.subr.mxu0 0.0
    %131 = vmatpush1.msra.mxu0 0.0
    %132 = vmatprep.subr.mxu0 0.0
    %133 = vmatpush1.msra.mxu0 0.0
    %134 = vmatprep.subr.mxu0 0.0
    %135 = vmatpush1.msra.mxu0 0.0
    %136 = vmatprep.subr.mxu0 0.0
    %137 = vmatpush1.msra.mxu0 0.0
    %138 = vmatprep.subr.mxu0 0.0
    %139 = vmatpush1.msra.mxu0 0.0
    %140 = vmatprep.subr.mxu0 0.0
    %141 = vmatpush1.msra.mxu0 0.0
    %142 = vmatprep.subr.mxu0 0.0
    %143 = vmatpush1.msra.mxu0 0.0
    %144 = vmatprep.subr.mxu0 0.0
    %145 = vmatpush1.msra.mxu0 0.0
    %146 = vmatprep.subr.mxu0 0.0
    %147 = vmatpush1.msra.mxu0 0.0
    %148 = vmatprep.subr.mxu0 0.0
    %149 = vmatpush1.msra.mxu0 0.0
    %150 = vmatprep.subr.mxu0 0.0
    %151 = vmatpush1.msra.mxu0 0.0
    %152 = vmatprep.mubr.f32.mxu0 0.0
    %153 = vmatmul.mubr.f32.gmra.mrb[0].mxu0 %v65
    %v154 = vpop.f32.mrb[0].mxu0
    %v155 = vadd.f32 %v51, %v154
    %v156 = vpop.f32.mrb[0].mxu0
    %v157 = vadd.f32 %v55, %v156
    %158 = vmatprep.mubr.f32.mxu0 0.0
    %159 = vmatmul.mubr.f32.gmra.mrb[0].mxu0 %v68
    %v160 = vpop.f32.mrb[0].mxu0
    %v161 = vadd.f32 %v51, %v160
    %v162 = vpop.f32.mrb[0].mxu0
    %v163 = vadd.f32 %v55, %v162
    %164 = vmatprep.mubr.f32.mxu0 0.0
    %165 = vmatmul.mubr.f32.gmra.mrb[0].mxu0 %v71
    %v166 = vpop.f32.mrb[0].mxu0
    %v167 = vadd.f32 %v51, %v166
    %v168 = vpop.f32.mrb[0].mxu0
    %v169 = vadd.f32 %v55, %v168
    %170 = vmatprep.mubr.f32.mxu0 0.0
    %171 = vmatmul.mubr.f32.gmra.mrb[0].mxu0 %v74
    %v172 = vpop.f32.mrb[0].mxu0
    %v173 = vadd.f32 %v51, %v172
    %v174 = vpop.f32.mrb[0].mxu0
    %v175 = vadd.f32 %v55, %v174
    %176 = vmatprep.mubr.f32.mxu0 0.0
    %177 = vmatmul.mubr.f32.gmra.mrb[0].mxu0 %v77
    %v178 = vpop.f32.mrb[0].mxu0
    %v179 = vadd.f32 %v51, %v178
    %v180 = vpop.f32.mrb[0].mxu0
    %v181 = vadd.f32 %v55, %v180
    %182 = vmatprep.mubr.f32.mxu0 0.0
    %183 = vmatmul.mubr.f32.gmra.mrb[0].mxu0 %v80
    %v184 = vpop.f32.mrb[0].mxu0
    %v185 = vadd.f32 %v51, %v184
    %v186 = vpop.f32.mrb[0].mxu0
    %v187 = vadd.f32 %v55, %v186
    %188 = vmatprep.mubr.f32.mxu0 0.0
    %189 = vmatmul.mubr.f32.gmra.mrb[0].mxu0 %v83
    %v190 = vpop.f32.mrb[0].mxu0
    %v191 = vadd.f32 %v51, %v190
    %v192 = vpop.f32.mrb[0].mxu0
    %v193 = vadd.f32 %v55, %v192
    %194 = vmatprep.mubr.f32.mxu0 0.0
    %195 = vmatmul.mubr.f32.gmra.mrb[0].mxu0 %v86
    %v196 = vpop.f32.mrb[0].mxu0
    %v197 = vadd.f32 %v51, %v196
    %v198 = vpop.f32.mrb[0].mxu0
    %v199 = vadd.f32 %v55, %v198
    %200 = vdwg.mxu0
    %201 = vmatprep.subr.mxu0 0.0
    %202 = vmatpush1.msra.mxu0 %v42
    %203 = vmatprep.subr.mxu0 0.0
    %204 = vmatpush1.msra.mxu0 %v45
    %205 = vmatprep.subr.mxu0 0.0
    %206 = vmatpush1.msra.mxu0 0.0
    %207 = vmatprep.subr.mxu0 0.0
    %208 = vmatpush1.msra.mxu0 0.0
    %209 = vmatprep.subr.mxu0 0.0
    %210 = vmatpush1.msra.mxu0 0.0
    %211 = vmatprep.subr.mxu0 0.0
    %212 = vmatpush1.msra.mxu0 0.0
    %213 = vmatprep.subr.mxu0 0.0
    %214 = vmatpush1.msra.mxu0 0.0
    %215 = vmatprep.subr.mxu0 0.0
    %216 = vmatpush1.msra.mxu0 0.0
    %217 = vmatprep.subr.mxu0 0.0
    %218 = vmatpush1.msra.mxu0 0.0
    %219 = vmatprep.subr.mxu0 0.0
    %220 = vmatpush1.msra.mxu0 0.0
    %221 = vmatprep.subr.mxu0 0.0
    %222 = vmatpush1.msra.mxu0 0.0
    %223 = vmatprep.subr.mxu0 0.0
    %224 = vmatpush1.msra.mxu0 0.0
    %225 = vmatprep.subr.mxu0 0.0
    %226 = vmatpush1.msra.mxu0 0.0
    %227 = vmatprep.subr.mxu0 0.0
    %228 = vmatpush1.msra.mxu0 0.0
    %229 = vmatprep.subr.mxu0 0.0
    %230 = vmatpush1.msra.mxu0 0.0
    %231 = vmatprep.subr.mxu0 0.0
    %232 = vmatpush1.msra.mxu0 0.0
    %233 = vmatprep.subr.mxu0 0.0
    %234 = vmatpush1.msra.mxu0 0.0
    %235 = vmatprep.subr.mxu0 0.0
    %236 = vmatpush1.msra.mxu0 0.0
    %237 = vmatprep.subr.mxu0 0.0
    %238 = vmatpush1.msra.mxu0 0.0
    %239 = vmatprep.subr.mxu0 0.0
    %240 = vmatpush1.msra.mxu0 0.0
    %241 = vmatprep.subr.mxu0 0.0
    %242 = vmatpush1.msra.mxu0 0.0
    %243 = vmatprep.subr.mxu0 0.0
    %244 = vmatpush1.msra.mxu0 0.0
    %245 = vmatprep.subr.mxu0 0.0
    %246 = vmatpush1.msra.mxu0 0.0
    %247 = vmatprep.subr.mxu0 0.0
    %248 = vmatpush1.msra.mxu0 0.0
    %249 = vmatprep.subr.mxu0 0.0
    %250 = vmatpush1.msra.mxu0 0.0
    %251 = vmatprep.subr.mxu0 0.0
    %252 = vmatpush1.msra.mxu0 0.0
    %253 = vmatprep.subr.mxu0 0.0
    %254 = vmatpush1.msra.mxu0 0.0
    %255 = vmatprep.subr.mxu0 0.0
    %256 = vmatpush1.msra.mxu0 0.0
    %257 = vmatprep.subr.mxu0 0.0
    %258 = vmatpush1.msra.mxu0 0.0
    %259 = vmatprep.subr.mxu0 0.0
    %260 = vmatpush1.msra.mxu0 0.0
    %261 = vmatprep.subr.mxu0 0.0
    %262 = vmatpush1.msra.mxu0 0.0
    %263 = vmatprep.subr.mxu0 0.0
    %264 = vmatpush1.msra.mxu0 0.0
    %265 = vmatprep.mubr.f32.mxu0 0.0
    %266 = vmatmul.mubr.f32.gmra.mrb[0].mxu0 %v65
    %v267 = vpop.f32.mrb[0].mxu0
    %v268 = vadd.f32 %v59, %v267
    %v269 = vpop.f32.mrb[0].mxu0
    %270 = vmatprep.mubr.f32.mxu0 0.0
    %271 = vmatmul.mubr.f32.gmra.mrb[0].mxu0 %v68
    %v272 = vpop.f32.mrb[0].mxu0
    %v273 = vadd.f32 %v59, %v272
    %v274 = vpop.f32.mrb[0].mxu0
    %275 = vmatprep.mubr.f32.mxu0 0.0
    %276 = vmatmul.mubr.f32.gmra.mrb[0].mxu0 %v71
    %v277 = vpop.f32.mrb[0].mxu0
    %v278 = vadd.f32 %v59, %v277
    %v279 = vpop.f32.mrb[0].mxu0
    %280 = vmatprep.mubr.f32.mxu0 0.0
    %281 = vmatmul.mubr.f32.gmra.mrb[0].mxu0 %v74
    %v282 = vpop.f32.mrb[0].mxu0
    %v283 = vadd.f32 %v59, %v282
    %v284 = vpop.f32.mrb[0].mxu0
    %285 = vmatprep.mubr.f32.mxu0 0.0
    %286 = vmatmul.mubr.f32.gmra.mrb[0].mxu0 %v77
    %v287 = vpop.f32.mrb[0].mxu0
    %v288 = vadd.f32 %v59, %v287
    %v289 = vpop.f32.mrb[0].mxu0
    %290 = vmatprep.mubr.f32.mxu0 0.0
    %291 = vmatmul.mubr.f32.gmra.mrb[0].mxu0 %v80
    %v292 = vpop.f32.mrb[0].mxu0
    %v293 = vadd.f32 %v59, %v292
    %v294 = vpop.f32.mrb[0].mxu0
    %295 = vmatprep.mubr.f32.mxu0 0.0
    %296 = vmatmul.mubr.f32.gmra.mrb[0].mxu0 %v83
    %v297 = vpop.f32.mrb[0].mxu0
    %v298 = vadd.f32 %v59, %v297
    %v299 = vpop.f32.mrb[0].mxu0
    %300 = vmatprep.mubr.f32.mxu0 0.0
    %301 = vmatmul.mubr.f32.gmra.mrb[0].mxu0 %v86
    %v302 = vpop.f32.mrb[0].mxu0
    %v303 = vadd.f32 %v59, %v302
    %v304 = vpop.f32.mrb[0].mxu0
    %305 = vdwg.mxu0
    %v306 = vld [vmem:[%s3] sm:$0xff]
    %v307 = vld [vmem:[%s3 + $0x8] sm:$0xff]
    %v308 = vld [vmem:[%s3 + $0x10] sm:$0xff]
    %v309 = vld [vmem:[%s3 + $0x18] sm:$0xff]
    %v310 = vld [vmem:[%s3 + $0x20] sm:$0xff]
    %v311 = vld [vmem:[%s3 + $0x28] sm:$0xff]
    %v312 = vld [vmem:[%s3 + $0x30] sm:$0xff]
    %v313 = vld [vmem:[%s3 + $0x38] sm:$0xff]
    %314 = vmatprep.subr.mxu0 0.0
    %315 = vmatpush1.xpose.msra.mxu0 %v157
    %316 = vmatprep.subr.mxu0 0.0
    %317 = vmatpush1.xpose.msra.mxu0 %v163
    %318 = vmatprep.subr.mxu0 0.0
    %319 = vmatpush1.xpose.msra.mxu0 %v169
    %320 = vmatprep.subr.mxu0 0.0
    %321 = vmatpush1.xpose.msra.mxu0 %v175
    %322 = vmatprep.subr.mxu0 0.0
    %323 = vmatpush1.xpose.msra.mxu0 %v181
    %324 = vmatprep.subr.mxu0 0.0
    %325 = vmatpush1.xpose.msra.mxu0 %v187
    %326 = vmatprep.subr.mxu0 0.0
    %327 = vmatpush1.xpose.msra.mxu0 %v193
    %328 = vmatprep.subr.mxu0 0.0
    %329 = vmatpush1.xpose.msra.mxu0 %v199
    %330 = vmatprep.subr.mxu0 0.0
    %331 = vmatpush1.xpose.msra.mxu0 0.0
    %332 = vmatprep.subr.mxu0 0.0
    %333 = vmatpush1.xpose.msra.mxu0 0.0
    %334 = vmatprep.subr.mxu0 0.0
    %335 = vmatpush1.xpose.msra.mxu0 0.0
    %336 = vmatprep.subr.mxu0 0.0
    %337 = vmatpush1.xpose.msra.mxu0 0.0
    %338 = vmatprep.subr.mxu0 0.0
    %339 = vmatpush1.xpose.msra.mxu0 0.0
    %340 = vmatprep.subr.mxu0 0.0
    %341 = vmatpush1.xpose.msra.mxu0 0.0
    %342 = vmatprep.subr.mxu0 0.0
    %343 = vmatpush1.xpose.msra.mxu0 0.0
    %344 = vmatprep.subr.mxu0 0.0
    %345 = vmatpush1.xpose.msra.mxu0 0.0
    %346 = vmatprep.subr.mxu0 0.0
    %347 = vmatpush1.xpose.msra.mxu0 0.0
    %348 = vmatprep.subr.mxu0 0.0
    %349 = vmatpush1.xpose.msra.mxu0 0.0
    %350 = vmatprep.subr.mxu0 0.0
    %351 = vmatpush1.xpose.msra.mxu0 0.0
    %352 = vmatprep.subr.mxu0 0.0
    %353 = vmatpush1.xpose.msra.mxu0 0.0
    %354 = vmatprep.subr.mxu0 0.0
    %355 = vmatpush1.xpose.msra.mxu0 0.0
    %356 = vmatprep.subr.mxu0 0.0
    %357 = vmatpush1.xpose.msra.mxu0 0.0
    %358 = vmatprep.subr.mxu0 0.0
    %359 = vmatpush1.xpose.msra.mxu0 0.0
    %360 = vmatprep.subr.mxu0 0.0
    %361 = vmatpush1.xpose.msra.mxu0 0.0
    %362 = vmatprep.subr.mxu0 0.0
    %363 = vmatpush1.xpose.msra.mxu0 0.0
    %364 = vmatprep.subr.mxu0 0.0
    %365 = vmatpush1.xpose.msra.mxu0 0.0
    %366 = vmatprep.subr.mxu0 0.0
    %367 = vmatpush1.xpose.msra.mxu0 0.0
    %368 = vmatprep.subr.mxu0 0.0
    %369 = vmatpush1.xpose.msra.mxu0 0.0
    %370 = vmatprep.subr.mxu0 0.0
    %371 = vmatpush1.xpose.msra.mxu0 0.0
    %372 = vmatprep.subr.mxu0 0.0
    %373 = vmatpush1.xpose.msra.mxu0 0.0
    %374 = vmatprep.subr.mxu0 0.0
    %375 = vmatpush1.xpose.msra.mxu0 0.0
    %376 = vmatprep.subr.mxu0 0.0
    %377 = vmatpush1.xpose.msra.mxu0 0.0
    %378 = vmatprep.mubr.f32.mxu0 0.0
    %379 = vmatmul.mubr.f32.gmra.mrb[0].mxu0 %v155
    %v380 = vpop.f32.mrb[0].mxu0
    %v381 = vadd.f32 %v306, %v380
    %v382 = vpop.f32.mrb[0].mxu0
    %383 = vmatprep.mubr.f32.mxu0 0.0
    %384 = vmatmul.mubr.f32.gmra.mrb[0].mxu0 %v161
    %v385 = vpop.f32.mrb[0].mxu0
    %v386 = vadd.f32 %v307, %v385
    %v387 = vpop.f32.mrb[0].mxu0
    %388 = vmatprep.mubr.f32.mxu0 0.0
    %389 = vmatmul.mubr.f32.gmra.mrb[0].mxu0 %v167
    %v390 = vpop.f32.mrb[0].mxu0
    %v391 = vadd.f32 %v308, %v390
    %v392 = vpop.f32.mrb[0].mxu0
    %393 = vmatprep.mubr.f32.mxu0 0.0
    %394 = vmatmul.mubr.f32.gmra.mrb[0].mxu0 %v173
    %v395 = vpop.f32.mrb[0].mxu0
    %v396 = vadd.f32 %v309, %v395
    %v397 = vpop.f32.mrb[0].mxu0
    %398 = vmatprep.mubr.f32.mxu0 0.0
    %399 = vmatmul.mubr.f32.gmra.mrb[0].mxu0 %v179
    %v400 = vpop.f32.mrb[0].mxu0
    %v401 = vadd.f32 %v310, %v400
    %v402 = vpop.f32.mrb[0].mxu0
    %403 = vmatprep.mubr.f32.mxu0 0.0
    %404 = vmatmul.mubr.f32.gmra.mrb[0].mxu0 %v185
    %v405 = vpop.f32.mrb[0].mxu0
    %v406 = vadd.f32 %v311, %v405
    %v407 = vpop.f32.mrb[0].mxu0
    %408 = vmatprep.mubr.f32.mxu0 0.0
    %409 = vmatmul.mubr.f32.gmra.mrb[0].mxu0 %v191
    %v410 = vpop.f32.mrb[0].mxu0
    %v411 = vadd.f32 %v312, %v410
    %v412 = vpop.f32.mrb[0].mxu0
    %413 = vmatprep.mubr.f32.mxu0 0.0
    %414 = vmatmul.mubr.f32.gmra.mrb[0].mxu0 %v197
    %v415 = vpop.f32.mrb[0].mxu0
    %v416 = vadd.f32 %v313, %v415
    %v417 = vpop.f32.mrb[0].mxu0
    %418 = vdwg.mxu0
    %vm419 = vcmask 523264
    %v420 = vsel %vm419, %v381, -inf
    %421 = vmax.xlane.f32.xlu0 %v420
    %v422 = vpop.xlane.xlu0 %421
    %v423 = vsel %vm419, %v386, -inf
    %424 = vmax.xlane.f32.xlu0 %v423
    %v425 = vpop.xlane.xlu0 %424
    %v426 = vsel %vm419, %v391, -inf
    %427 = vmax.xlane.f32.xlu0 %v426
    %v428 = vpop.xlane.xlu0 %427
    %v429 = vsel %vm419, %v396, -inf
    %430 = vmax.xlane.f32.xlu0 %v429
    %v431 = vpop.xlane.xlu0 %430
    %v432 = vsel %vm419, %v401, -inf
    %433 = vmax.xlane.f32.xlu0 %v432
    %v434 = vpop.xlane.xlu0 %433
    %v435 = vsel %vm419, %v406, -inf
    %436 = vmax.xlane.f32.xlu0 %v435
    %v437 = vpop.xlane.xlu0 %436
    %v438 = vsel %vm419, %v411, -inf
    %439 = vmax.xlane.f32.xlu0 %v438
    %v440 = vpop.xlane.xlu0 %439
    %v441 = vsel %vm419, %v416, -inf
    %442 = vmax.xlane.f32.xlu0 %v441
    %v443 = vpop.xlane.xlu0 %442
    %v444 = vsub.f32 %v381, %v422
    %v445 = vsub.f32 %v386, %v425
    %v446 = vsub.f32 %v391, %v428
    %v447 = vsub.f32 %v396, %v431
    %v448 = vsub.f32 %v401, %v434
    %v449 = vsub.f32 %v406, %v437
    %v450 = vsub.f32 %v411, %v440
    %v451 = vsub.f32 %v416, %v443
    %v452 = vmul.f32 %v444, 1.442695
    %v453 = vpow.pop %v452
    %v454 = vmul.f32 %v445, 1.442695
    %v455 = vpow.pop %v454
    %v456 = vmul.f32 %v446, 1.442695
    %v457 = vpow.pop %v456
    %v458 = vmul.f32 %v447, 1.442695
    %v459 = vpow.pop %v458
    %v460 = vmul.f32 %v448, 1.442695
    %v461 = vpow.pop %v460
    %v462 = vmul.f32 %v449, 1.442695
    %v463 = vpow.pop %v462
    %v464 = vmul.f32 %v450, 1.442695
    %v465 = vpow.pop %v464
    %v466 = vmul.f32 %v451, 1.442695
    %v467 = vpow.pop %v466
    %v468 = vsel %vm419, %v453, 0.0
    %469 = vadd.xlane.f32.xlu0 %v468
    %v470 = vpop.xlane.xlu0 %469
    %v471 = vsel %vm419, %v455, 0.0
    %472 = vadd.xlane.f32.xlu0 %v471
    %v473 = vpop.xlane.xlu0 %472
    %v474 = vsel %vm419, %v457, 0.0
    %475 = vadd.xlane.f32.xlu0 %v474
    %v476 = vpop.xlane.xlu0 %475
    %v477 = vsel %vm419, %v459, 0.0
    %478 = vadd.xlane.f32.xlu0 %v477
    %v479 = vpop.xlane.xlu0 %478
    %v480 = vsel %vm419, %v461, 0.0
    %481 = vadd.xlane.f32.xlu0 %v480
    %v482 = vpop.xlane.xlu0 %481
    %v483 = vsel %vm419, %v463, 0.0
    %484 = vadd.xlane.f32.xlu0 %v483
    %v485 = vpop.xlane.xlu0 %484
    %v486 = vsel %vm419, %v465, 0.0
    %487 = vadd.xlane.f32.xlu0 %v486
    %v488 = vpop.xlane.xlu0 %487
    %v489 = vsel %vm419, %v467, 0.0
    %490 = vadd.xlane.f32.xlu0 %v489
    %v491 = vpop.xlane.xlu0 %490
    %v492 = vrcp.pop %v470
    %v493 = vrcp.pop %v473
    %v494 = vrcp.pop %v476
    %v495 = vrcp.pop %v479
    %v496 = vrcp.pop %v482
    %v497 = vrcp.pop %v485
    %v498 = vrcp.pop %v488
    %v499 = vrcp.pop %v491
    %v500 = vmul.f32 %v453, %v492
    %v501 = vmul.f32 %v455, %v493
    %v502 = vmul.f32 %v457, %v494
    %v503 = vmul.f32 %v459, %v495
    %v504 = vmul.f32 %v461, %v496
    %v505 = vmul.f32 %v463, %v497
    %v506 = vmul.f32 %v465, %v498
    %v507 = vmul.f32 %v467, %v499
    %v509 = vsel %vm419, %v500, 0
    %v512 = vsel %vm419, %v501, 0
    %v515 = vsel %vm419, %v502, 0
    %v518 = vsel %vm419, %v503, 0
    %v521 = vsel %vm419, %v504, 0
    %v524 = vsel %vm419, %v505, 0
    %v527 = vsel %vm419, %v506, 0
    %v530 = vsel %vm419, %v507, 0
    %532 = vmatprep.subr.mxu0 0.0
    %533 = vmatpush1.msra.mxu0 %v268
    %534 = vmatprep.subr.mxu0 0.0
    %535 = vmatpush1.msra.mxu0 %v273
    %536 = vmatprep.subr.mxu0 0.0
    %537 = vmatpush1.msra.mxu0 %v278
    %538 = vmatprep.subr.mxu0 0.0
    %539 = vmatpush1.msra.mxu0 %v283
    %540 = vmatprep.subr.mxu0 0.0
    %541 = vmatpush1.msra.mxu0 %v288
    %542 = vmatprep.subr.mxu0 0.0
    %543 = vmatpush1.msra.mxu0 %v293
    %544 = vmatprep.subr.mxu0 0.0
    %545 = vmatpush1.msra.mxu0 %v298
    %546 = vmatprep.subr.mxu0 0.0
    %547 = vmatpush1.msra.mxu0 %v303
    %548 = vmatprep.subr.mxu0 0.0
    %549 = vmatpush1.msra.mxu0 0.0
    %550 = vmatprep.subr.mxu0 0.0
    %551 = vmatpush1.msra.mxu0 0.0
    %552 = vmatprep.subr.mxu0 0.0
    %553 = vmatpush1.msra.mxu0 0.0
    %554 = vmatprep.subr.mxu0 0.0
    %555 = vmatpush1.msra.mxu0 0.0
    %556 = vmatprep.subr.mxu0 0.0
    %557 = vmatpush1.msra.mxu0 0.0
    %558 = vmatprep.subr.mxu0 0.0
    %559 = vmatpush1.msra.mxu0 0.0
    %560 = vmatprep.subr.mxu0 0.0
    %561 = vmatpush1.msra.mxu0 0.0
    %562 = vmatprep.subr.mxu0 0.0
    %563 = vmatpush1.msra.mxu0 0.0
    %564 = vmatprep.subr.mxu0 0.0
    %565 = vmatpush1.msra.mxu0 0.0
    %566 = vmatprep.subr.mxu0 0.0
    %567 = vmatpush1.msra.mxu0 0.0
    %568 = vmatprep.subr.mxu0 0.0
    %569 = vmatpush1.msra.mxu0 0.0
    %570 = vmatprep.subr.mxu0 0.0
    %571 = vmatpush1.msra.mxu0 0.0
    %572 = vmatprep.subr.mxu0 0.0
    %573 = vmatpush1.msra.mxu0 0.0
    %574 = vmatprep.subr.mxu0 0.0
    %575 = vmatpush1.msra.mxu0 0.0
    %576 = vmatprep.subr.mxu0 0.0
    %577 = vmatpush1.msra.mxu0 0.0
    %578 = vmatprep.subr.mxu0 0.0
    %579 = vmatpush1.msra.mxu0 0.0
    %580 = vmatprep.subr.mxu0 0.0
    %581 = vmatpush1.msra.mxu0 0.0
    %582 = vmatprep.subr.mxu0 0.0
    %583 = vmatpush1.msra.mxu0 0.0
    %584 = vmatprep.subr.mxu0 0.0
    %585 = vmatpush1.msra.mxu0 0.0
    %586 = vmatprep.subr.mxu0 0.0
    %587 = vmatpush1.msra.mxu0 0.0
    %588 = vmatprep.subr.mxu0 0.0
    %589 = vmatpush1.msra.mxu0 0.0
    %590 = vmatprep.subr.mxu0 0.0
    %591 = vmatpush1.msra.mxu0 0.0
    %592 = vmatprep.subr.mxu0 0.0
    %593 = vmatpush1.msra.mxu0 0.0
    %594 = vmatprep.subr.mxu0 0.0
    %595 = vmatpush1.msra.mxu0 0.0
    %596 = vmatprep.mubr.f32.mxu0 0.0
    %597 = vmatmul.mubr.f32.gmra.mrb[0].mxu0 %v509
    %v598 = vpop.f32.mrb[0].mxu0
    %v599 = vadd.f32 0.0, %v598
    %v600 = vpop.f32.mrb[0].mxu0
    %601 = vmatprep.mubr.f32.mxu0 0.0
    %602 = vmatmul.mubr.f32.gmra.mrb[0].mxu0 %v512
    %v603 = vpop.f32.mrb[0].mxu0
    %v604 = vadd.f32 0.0, %v603
    %v605 = vpop.f32.mrb[0].mxu0
    %606 = vmatprep.mubr.f32.mxu0 0.0
    %607 = vmatmul.mubr.f32.gmra.mrb[0].mxu0 %v515
    %v608 = vpop.f32.mrb[0].mxu0
    %v609 = vadd.f32 0.0, %v608
    %v610 = vpop.f32.mrb[0].mxu0
    %611 = vmatprep.mubr.f32.mxu0 0.0
    %612 = vmatmul.mubr.f32.gmra.mrb[0].mxu0 %v518
    %v613 = vpop.f32.mrb[0].mxu0
    %v614 = vadd.f32 0.0, %v613
    %v615 = vpop.f32.mrb[0].mxu0
    %616 = vmatprep.mubr.f32.mxu0 0.0
    %617 = vmatmul.mubr.f32.gmra.mrb[0].mxu0 %v521
    %v618 = vpop.f32.mrb[0].mxu0
    %v619 = vadd.f32 0.0, %v618
    %v620 = vpop.f32.mrb[0].mxu0
    %621 = vmatprep.mubr.f32.mxu0 0.0
    %622 = vmatmul.mubr.f32.gmra.mrb[0].mxu0 %v524
    %v623 = vpop.f32.mrb[0].mxu0
    %v624 = vadd.f32 0.0, %v623
    %v625 = vpop.f32.mrb[0].mxu0
    %626 = vmatprep.mubr.f32.mxu0 0.0
    %627 = vmatmul.mubr.f32.gmra.mrb[0].mxu0 %v527
    %v628 = vpop.f32.mrb[0].mxu0
    %v629 = vadd.f32 0.0, %v628
    %v630 = vpop.f32.mrb[0].mxu0
    %631 = vmatprep.mubr.f32.mxu0 0.0
    %632 = vmatmul.mubr.f32.gmra.mrb[0].mxu0 %v530
    %v633 = vpop.f32.mrb[0].mxu0
    %v634 = vadd.f32 0.0, %v633
    %v635 = vpop.f32.mrb[0].mxu0
    %636 = vdwg.mxu0
    %637 = vst [vmem:[#allocation5] sm:$0xff] %v599
    %638 = vst [vmem:[#allocation5 + $0x8] sm:$0xff] %v604
    %639 = vst [vmem:[#allocation5 + $0x10] sm:$0xff] %v609
    %640 = vst [vmem:[#allocation5 + $0x18] sm:$0xff] %v614
    %641 = vst [vmem:[#allocation5 + $0x20] sm:$0xff] %v619
    %642 = vst [vmem:[#allocation5 + $0x28] sm:$0xff] %v624
    %643 = vst [vmem:[#allocation5 + $0x30] sm:$0xff] %v629
    %644 = vst [vmem:[#allocation5 + $0x38] sm:$0xff] %v634
    // Predicated region
    $region22: #{tpu_custom_call.1} parent=1 // pred_check
      _
    $region23: #{tpu_custom_call.1} parent=1 // pred_check_branch
      %646 = sbr.rel (0) target = $region25
    $region24: #{tpu_custom_call.1} parent=1 // pred_region
      %s648 = ssub.s32 1024, 1024
      %649 = vsyncadd [#allocation4], %s648
      %s650 = sshll.u32 [#allocation5], 4
      %s651 = int_to_ptr.vmem [resolvable:$true] %s650
      %656 = dma.vmem_to_hbm [thread:$0]  %s651, 1024, %s4, [#allocation4], 128, 128, 8
    $region25: #{tpu_custom_call.1} parent=1 // pred_fallthru
      _
    // Predicated region
    $region26: #{tpu_custom_call.1} parent=1 // pred_check
      _
    $region27: #{tpu_custom_call.1} parent=1 // pred_check_branch
      %658 = sbr.rel (0) target = $region29
    $region28: #{tpu_custom_call.1} parent=1 // pred_region
      %659 = dma.done [#allocation4], 1024
    $region29: #{tpu_custom_call.1} parent=1 // pred_fallthru
      _
    %660 = vsyncpa [#allocation3], 1
    %661 = vsyncpa [#allocation4], 1

</llo_original>
